<compile_context>
chip_gen: v6e
topology: v6e:2x2x1
jax: 0.10.0
libtpu: 0.0.40
codegen_flags: <defaults>
</compile_context>

<pallas_src>
import jax
import jax.numpy as jnp
from jax import lax
from jax.experimental import pallas as pl
from jax.experimental.pallas import tpu as pltpu

LN_EPS = 1e-10  # matches the PyTorch module's nn.LayerNorm(eps=1e-10)


def _layer_norm(v, gamma, beta):
    # One-pass variance: E[x^2] - E[x]^2 (both reductions can issue back-to-back).
    mu = jnp.mean(v, axis=-1, keepdims=True)
    ms = jnp.mean(v * v, axis=-1, keepdims=True)
    var = ms - mu * mu
    return (v - mu) * lax.rsqrt(var + LN_EPS) * gamma + beta


def gru_cell_kernel(x_ref, h0_ref, wi_ref, wh_ref, p_ref, out_ref, h_scr):
    """One GRU step per grid iteration; weights/params stay VMEM-resident.

    x_ref : [1, B, D_in] bf16 (current time step)
    h0_ref: [B, H] f32 (initial hidden, read only at t == 0)
    wi_ref: [D_in, 3H] bf16, wh_ref: [H, 3H] bf16 (pre-transposed)
    p_ref : [16, H] f32 packed params
            rows 0-2 gamma_i, 3-5 beta_i, 6-8 gamma_h, 9-11 beta_h, 12-15 bias
    out_ref: [1, B, H] f32 (hidden state emitted at this step)
    h_scr : [B, H] f32 VMEM scratch carrying the recurrence.
    """
    t = pl.program_id(0)

    @pl.when(t == 0)
    def _():
        h_scr[...] = h0_ref[...]

    h = h_scr[...]                      # [B, H] f32
    x = x_ref[0]                        # [B, D_in] bf16
    H = h.shape[-1]

    # Hot path: two MXU matmuls (bf16 operands, f32 accumulation).
    i_gates = jnp.dot(x, wi_ref[...], preferred_element_type=jnp.float32)
    h_gates = jnp.dot(h.astype(jnp.bfloat16), wh_ref[...],
                      preferred_element_type=jnp.float32)

    # Per-gate LayerNorm (H is a multiple of 128 -> lane-aligned free slices).
    i_c, h_c = [], []
    for g in range(3):
        sl = slice(g * H, (g + 1) * H)
        i_c.append(_layer_norm(i_gates[:, sl], p_ref[g, :], p_ref[3 + g, :]))
        h_c.append(_layer_norm(h_gates[:, sl], p_ref[6 + g, :], p_ref[9 + g, :]))

    b0 = p_ref[12, :]
    b1 = p_ref[13, :]
    b2 = p_ref[14, :]
    b3 = p_ref[15, :]

    resetgate = jax.nn.sigmoid(i_c[0] + h_c[0] + b0)
    updategate = jax.nn.sigmoid(i_c[1] + h_c[1] + b1)
    newgate = jnp.tanh(i_c[2] + b2 + resetgate * (h_c[2] + b3))
    hy = (1.0 - updategate) * newgate + updategate * h

    h_scr[...] = hy
    out_ref[0] = hy.astype(out_ref.dtype)


def prepare_gru_params(w_i, w_h, gln_i, bln_i, gln_h, bln_h, gates_bias):
    """One-time parameter prep (transpose / cast / pack) hoisted out of the step path.

    w_i: [3H, D_in], w_h: [3H, H] (PyTorch nn.Linear layout).
    Returns (wi_t [D_in,3H] bf16, wh_t [H,3H] bf16, packed [16,H] f32).
    """
    H = w_h.shape[-1]
    assert H % 128 == 0, "hidden_size must be a multiple of 128 (lane alignment)"
    wi_t = jnp.asarray(w_i, jnp.float32).T.astype(jnp.bfloat16)    # [D_in, 3H]
    wh_t = jnp.asarray(w_h, jnp.float32).T.astype(jnp.bfloat16)    # [H, 3H]
    packed = jnp.concatenate([
        jnp.asarray(gln_i, jnp.float32),                           # rows 0-2
        jnp.asarray(bln_i, jnp.float32),                           # rows 3-5
        jnp.asarray(gln_h, jnp.float32),                           # rows 6-8
        jnp.asarray(bln_h, jnp.float32),                           # rows 9-11
        jnp.asarray(gates_bias, jnp.float32).reshape(4, H),        # rows 12-15
    ], axis=0)                                                     # [16, H]
    return wi_t, wh_t, packed


def gru_sequence_forward(x_seq, h0, wi_t, wh_t, packed):
    """Run the GRU recurrence over a whole sequence in one pallas_call.

    x_seq: [T, B, D_in], h0: [B, H]. Returns hy_seq: [T, B, H] (hidden at every step).
    Weights / params are DMA'd once and stay resident in VMEM for all T steps.
    """
    T, B, D = x_seq.shape
    H = h0.shape[-1]

    cost = pl.CostEstimate(
        flops=2 * T * B * 3 * H * (D + H),
        transcendentals=3 * T * B * H,                  # 2x sigmoid + tanh per element
        bytes_accessed=(wi_t.size + wh_t.size) * 2      # bf16 weights (read once)
                       + T * B * D * 2                  # bf16 inputs
                       + B * H * 4 + packed.size * 4    # h0 + packed params
                       + T * B * H * 4,                 # f32 outputs
    )

    return pl.pallas_call(
        gru_cell_kernel,
        out_shape=jax.ShapeDtypeStruct((T, B, H), jnp.float32),
        grid=(T,),
        in_specs=[
            pl.BlockSpec((1, B, D), lambda t: (t, 0, 0)),     # x_t streamed per step
            pl.BlockSpec((B, H), lambda t: (0, 0)),           # h0 (resident)
            pl.BlockSpec((D, 3 * H), lambda t: (0, 0)),       # W_i^T (resident)
            pl.BlockSpec((H, 3 * H), lambda t: (0, 0)),       # W_h^T (resident)
            pl.BlockSpec((16, H), lambda t: (0, 0)),          # packed LN/bias (resident)
        ],
        out_specs=pl.BlockSpec((1, B, H), lambda t: (t, 0, 0)),
        scratch_shapes=[pltpu.VMEM((B, H), jnp.float32)],     # carried hidden state
        compiler_params=pltpu.CompilerParams(
            dimension_semantics=("arbitrary",)),              # sequential recurrence
        cost_estimate=cost,
    )(x_seq.astype(jnp.bfloat16), jnp.asarray(h0, jnp.float32), wi_t, wh_t, packed)


def gru_cell_forward(inp, hx, wi_t, wh_t, packed):
    """Single-step forward matching the PyTorch module: (inp, hx) -> (hy, hy)."""
    hy = gru_sequence_forward(inp[None], hx, wi_t, wh_t, packed)[0]
    return hy, hy


# ----------------------------- pure-JAX references -----------------------------

def _ln_ref(v, gamma, beta):
    mu = jnp.mean(v, axis=-1, keepdims=True)
    var = jnp.mean(jnp.square(v - mu), axis=-1, keepdims=True)
    return (v - mu) * lax.rsqrt(var + LN_EPS) * gamma + beta


def gru_cell_reference(inp, hx, w_i, w_h, gln_i, bln_i, gln_h, bln_h, gates_bias,
                       *, bf16_matmul=False):
    """Mirrors the PyTorch forward. bf16_matmul=True mimics the kernel's MXU dtypes."""
    H = hx.shape[-1]
    if bf16_matmul:
        i_gates = jnp.dot(inp.astype(jnp.bfloat16), w_i.T.astype(jnp.bfloat16),
                          preferred_element_type=jnp.float32)
        h_gates = jnp.dot(hx.astype(jnp.bfloat16), w_h.T.astype(jnp.bfloat16),
                          preferred_element_type=jnp.float32)
    else:
        i_gates = inp @ w_i.T
        h_gates = hx @ w_h.T
    bias = gates_bias.reshape(4, H)
    i_c, h_c = [], []
    for g in range(3):
        sl = slice(g * H, (g + 1) * H)
        i_c.append(_ln_ref(i_gates[:, sl], gln_i[g], bln_i[g]))
        h_c.append(_ln_ref(h_gates[:, sl], gln_h[g], bln_h[g]))
    reset = jax.nn.sigmoid(i_c[0] + h_c[0] + bias[0])
    update = jax.nn.sigmoid(i_c[1] + h_c[1] + bias[1])
    new = jnp.tanh(i_c[2] + bias[2] + reset * (h_c[2] + bias[3]))
    return (1.0 - update) * new + update * hx


def gru_sequence_reference(x_seq, h0, *params, bf16_matmul=False):
    def step(h, x):
        hy = gru_cell_reference(x, h, *params, bf16_matmul=bf16_matmul)
        return hy, hy
    _, ys = lax.scan(step, h0, x_seq)
    return ys


if __name__ == "__main__":
    B, D_IN, H, T = 8, 64, 128, 8

    key = jax.random.PRNGKey(0)
    ks = jax.random.split(key, 10)

    # Deterministic synthetic parameters (shapes match the PyTorch __init__).
    inp = jax.random.normal(ks[0], (B, D_IN), jnp.float32)
    hx = jax.random.normal(ks[1], (B, H), jnp.float32)
    w_i = jax.random.normal(ks[2], (3 * H, D_IN), jnp.float32) * (1.0 / jnp.sqrt(D_IN))
    w_h = jax.random.normal(ks[3], (3 * H, H), jnp.float32) * (1.0 / jnp.sqrt(H))
    gates_bias = 0.1 * jax.random.normal(ks[4], (4 * H,), jnp.float32)
    gln_i = 1.0 + 0.05 * jax.random.normal(ks[5], (3, H), jnp.float32)
    bln_i = 0.05 * jax.random.normal(ks[6], (3, H), jnp.float32)
    gln_h = 1.0 + 0.05 * jax.random.normal(ks[7], (3, H), jnp.float32)
    bln_h = 0.05 * jax.random.normal(ks[8], (3, H), jnp.float32)
    x_seq = jax.random.normal(ks[9], (T, B, D_IN), jnp.float32)

    params = (w_i, w_h, gln_i, bln_i, gln_h, bln_h, gates_bias)
    wi_t, wh_t, packed = prepare_gru_params(*params)   # one-time prep (hoisted)

    # --- single step: original module forward semantics (T = 1) ---
    hy, _ = gru_cell_forward(inp, hx, wi_t, wh_t, packed)
    hy = jax.block_until_ready(hy)
    assert hy.shape == (B, H)
    ref_bf16 = gru_cell_reference(inp, hx, *params, bf16_matmul=True)
    ref_f32 = gru_cell_reference(inp, hx, *params, bf16_matmul=False)
    assert jnp.allclose(hy, ref_bf16, atol=5e-3, rtol=0.0), \
        "step mismatch vs bf16-matmul JAX reference"
    assert jnp.allclose(hy, ref_f32, atol=1e-1, rtol=0.0), \
        "step mismatch vs f32 JAX reference"

    # --- full sequence: weights stay VMEM-resident across all T grid steps ---
    hy_seq = jax.block_until_ready(
        gru_sequence_forward(x_seq, hx, wi_t, wh_t, packed))
    assert hy_seq.shape == (T, B, H)
    ref_seq = gru_sequence_reference(x_seq, hx, *params, bf16_matmul=True)
    assert jnp.allclose(hy_seq, ref_seq, atol=5e-3, rtol=0.0), \
        "sequence mismatch vs scanned JAX reference"

    print("KERNEL_OK")
</pallas_src>

<mosaic_0001>
module attributes {stable_mosaic.version = 11 : i64} {
  func.func @gru_cell_kernel(%arg0: i32, %arg1: memref<1x8x64xbf16, #tpu.memory_space<vmem>>, %arg2: memref<8x128xf32, #tpu.memory_space<vmem>>, %arg3: memref<64x384xbf16, #tpu.memory_space<vmem>>, %arg4: memref<128x384xbf16, #tpu.memory_space<vmem>>, %arg5: memref<16x128xf32, #tpu.memory_space<vmem>>, %arg6: memref<1x8x128xf32, #tpu.memory_space<vmem>>, %arg7: memref<8x128xf32, #tpu.memory_space<vmem>>) attributes {dimension_semantics = [#tpu.dimension_semantics<arbitrary>], iteration_bounds = array<i64: 1>, scalar_prefetch = 0 : i64, scratch_operands = 1 : i64, tpu.core_type = #tpu.core_type<tc>, window_params = [{transform_indices = @transform_0, window_bounds = array<i64: 1, 8, 64>}, {pipeline_mode = #tpu.pipeline_mode<synchronous>, transform_indices = @transform_1, window_bounds = array<i64: 8, 128>}, {pipeline_mode = #tpu.pipeline_mode<synchronous>, transform_indices = @transform_2, window_bounds = array<i64: 64, 384>}, {pipeline_mode = #tpu.pipeline_mode<synchronous>, transform_indices = @transform_3, window_bounds = array<i64: 128, 384>}, {pipeline_mode = #tpu.pipeline_mode<synchronous>, transform_indices = @transform_4, window_bounds = array<i64: 16, 128>}, {transform_indices = @transform_5, window_bounds = array<i64: 1, 8, 128>}]} {
    %c0_i32 = arith.constant 0 : i32
    %0 = arith.cmpi eq, %arg0, %c0_i32 : i32
    %1 = arith.extui %0 : i1 to i32
    %c0_i32_0 = arith.constant 0 : i32
    %2 = arith.cmpi ne, %1, %c0_i32_0 : i32
    scf.if %2 {
      %c0_65 = arith.constant 0 : index
      %c0_66 = arith.constant 0 : index
      %229 = vector.load %arg2[%c0_65, %c0_66] : memref<8x128xf32, #tpu.memory_space<vmem>>, vector<8x128xf32>
      %c0_67 = arith.constant 0 : index
      %c0_68 = arith.constant 0 : index
      %230 = vector.load %arg7[%c0_67, %c0_68] : memref<8x128xf32, #tpu.memory_space<vmem>>, vector<8x128xf32>
      tpu.vector_store %arg7[%c0_67, %c0_68], %229 {strides = array<i32>} : memref<8x128xf32, #tpu.memory_space<vmem>>, vector<8x128xf32>,
    } else {
    }
    %c0 = arith.constant 0 : index
    %c0_1 = arith.constant 0 : index
    %3 = vector.load %arg7[%c0, %c0_1] : memref<8x128xf32, #tpu.memory_space<vmem>>, vector<8x128xf32>
    %c0_2 = arith.constant 0 : index
    %c0_3 = arith.constant 0 : index
    %c0_4 = arith.constant 0 : index
    %4 = vector.load %arg1[%c0_2, %c0_3, %c0_4] : memref<1x8x64xbf16, #tpu.memory_space<vmem>>, vector<1x8x64xbf16>
    %5 = vector.shape_cast %4 : vector<1x8x64xbf16> to vector<8x64xbf16>
    %c0_5 = arith.constant 0 : index
    %c0_6 = arith.constant 0 : index
    %6 = vector.load %arg3[%c0_5, %c0_6] : memref<64x384xbf16, #tpu.memory_space<vmem>>, vector<64x384xbf16>
    %cst = arith.constant dense<0.000000e+00> : vector<8x384xf32>
    %7 = tpu.matmul %5, %6, %cst {dimension_numbers = #tpu.dot_dimension_numbers<[1], [0], [0], [1], [0, 0, 1, 1], [], []>} : vector<8x64xbf16>, vector<64x384xbf16>, vector<8x384xf32> -> vector<8x384xf32>
    %8 = arith.truncf %3 : vector<8x128xf32> to vector<8x128xbf16>
    %c0_7 = arith.constant 0 : index
    %c0_8 = arith.constant 0 : index
    %9 = vector.load %arg4[%c0_7, %c0_8] : memref<128x384xbf16, #tpu.memory_space<vmem>>, vector<128x384xbf16>
    %cst_9 = arith.constant dense<0.000000e+00> : vector<8x384xf32>
    %10 = tpu.matmul %8, %9, %cst_9 {dimension_numbers = #tpu.dot_dimension_numbers<[1], [0], [0], [1], [0, 0, 1, 1], [], []>} : vector<8x128xbf16>, vector<128x384xbf16>, vector<8x384xf32> -> vector<8x384xf32>
    %11 = vector.extract_strided_slice %7 {offsets = [0, 0], sizes = [8, 128], strides = [1, 1]} : vector<8x384xf32> to vector<8x128xf32>
    %c0_10 = arith.constant 0 : index
    %c0_11 = arith.constant 0 : index
    %12 = vector.load %arg5[%c0_10, %c0_11] : memref<16x128xf32, #tpu.memory_space<vmem>>, vector<1x128xf32>
    %13 = vector.shape_cast %12 : vector<1x128xf32> to vector<128xf32>
    %c3 = arith.constant 3 : index
    %c0_12 = arith.constant 0 : index
    %14 = vector.load %arg5[%c3, %c0_12] : memref<16x128xf32, #tpu.memory_space<vmem>>, vector<1x128xf32>
    %15 = vector.shape_cast %14 : vector<1x128xf32> to vector<128xf32>
    %cst_13 = arith.constant dense<0.000000e+00> : vector<8xf32>
    %16 = vector.multi_reduction <add>, %11, %cst_13 [1] : vector<8x128xf32> to vector<8xf32>
    %17 = vector.shape_cast %16 : vector<8xf32> to vector<8x1xf32>
    %cst_14 = arith.constant 1.280000e+02 : f32
    %18 = vector.broadcast %cst_14 : f32 to vector<8x1xf32>
    %19 = arith.divf %17, %18 : vector<8x1xf32>
    %20 = arith.mulf %11, %11 : vector<8x128xf32>
    %cst_15 = arith.constant dense<0.000000e+00> : vector<8xf32>
    %21 = vector.multi_reduction <add>, %20, %cst_15 [1] : vector<8x128xf32> to vector<8xf32>
    %22 = vector.shape_cast %21 : vector<8xf32> to vector<8x1xf32>
    %cst_16 = arith.constant 1.280000e+02 : f32
    %23 = vector.broadcast %cst_16 : f32 to vector<8x1xf32>
    %24 = arith.divf %22, %23 : vector<8x1xf32>
    %25 = arith.mulf %19, %19 : vector<8x1xf32>
    %26 = arith.subf %24, %25 : vector<8x1xf32>
    %27 = vector.broadcast %19 : vector<8x1xf32> to vector<8x128xf32>
    %28 = arith.subf %11, %27 : vector<8x128xf32>
    %cst_17 = arith.constant 1.000000e-10 : f32
    %29 = vector.broadcast %cst_17 : f32 to vector<8x1xf32>
    %30 = arith.addf %26, %29 : vector<8x1xf32>
    %31 = math.rsqrt %30 : vector<8x1xf32>
    %32 = vector.broadcast %31 : vector<8x1xf32> to vector<8x128xf32>
    %33 = arith.mulf %28, %32 : vector<8x128xf32>
    %34 = vector.shape_cast %13 : vector<128xf32> to vector<1x128xf32>
    %35 = vector.broadcast %34 : vector<1x128xf32> to vector<8x128xf32>
    %36 = arith.mulf %33, %35 : vector<8x128xf32>
    %37 = vector.shape_cast %15 : vector<128xf32> to vector<1x128xf32>
    %38 = vector.broadcast %37 : vector<1x128xf32> to vector<8x128xf32>
    %39 = arith.addf %36, %38 : vector<8x128xf32>
    %40 = vector.extract_strided_slice %10 {offsets = [0, 0], sizes = [8, 128], strides = [1, 1]} : vector<8x384xf32> to vector<8x128xf32>
    %c6 = arith.constant 6 : index
    %c0_18 = arith.constant 0 : index
    %41 = vector.load %arg5[%c6, %c0_18] : memref<16x128xf32, #tpu.memory_space<vmem>>, vector<1x128xf32>
    %42 = vector.shape_cast %41 : vector<1x128xf32> to vector<128xf32>
    %c9 = arith.constant 9 : index
    %c0_19 = arith.constant 0 : index
    %43 = vector.load %arg5[%c9, %c0_19] : memref<16x128xf32, #tpu.memory_space<vmem>>, vector<1x128xf32>
    %44 = vector.shape_cast %43 : vector<1x128xf32> to vector<128xf32>
    %cst_20 = arith.constant dense<0.000000e+00> : vector<8xf32>
    %45 = vector.multi_reduction <add>, %40, %cst_20 [1] : vector<8x128xf32> to vector<8xf32>
    %46 = vector.shape_cast %45 : vector<8xf32> to vector<8x1xf32>
    %cst_21 = arith.constant 1.280000e+02 : f32
    %47 = vector.broadcast %cst_21 : f32 to vector<8x1xf32>
    %48 = arith.divf %46, %47 : vector<8x1xf32>
    %49 = arith.mulf %40, %40 : vector<8x128xf32>
    %cst_22 = arith.constant dense<0.000000e+00> : vector<8xf32>
    %50 = vector.multi_reduction <add>, %49, %cst_22 [1] : vector<8x128xf32> to vector<8xf32>
    %51 = vector.shape_cast %50 : vector<8xf32> to vector<8x1xf32>
    %cst_23 = arith.constant 1.280000e+02 : f32
    %52 = vector.broadcast %cst_23 : f32 to vector<8x1xf32>
    %53 = arith.divf %51, %52 : vector<8x1xf32>
    %54 = arith.mulf %48, %48 : vector<8x1xf32>
    %55 = arith.subf %53, %54 : vector<8x1xf32>
    %56 = vector.broadcast %48 : vector<8x1xf32> to vector<8x128xf32>
    %57 = arith.subf %40, %56 : vector<8x128xf32>
    %cst_24 = arith.constant 1.000000e-10 : f32
    %58 = vector.broadcast %cst_24 : f32 to vector<8x1xf32>
    %59 = arith.addf %55, %58 : vector<8x1xf32>
    %60 = math.rsqrt %59 : vector<8x1xf32>
    %61 = vector.broadcast %60 : vector<8x1xf32> to vector<8x128xf32>
    %62 = arith.mulf %57, %61 : vector<8x128xf32>
    %63 = vector.shape_cast %42 : vector<128xf32> to vector<1x128xf32>
    %64 = vector.broadcast %63 : vector<1x128xf32> to vector<8x128xf32>
    %65 = arith.mulf %62, %64 : vector<8x128xf32>
    %66 = vector.shape_cast %44 : vector<128xf32> to vector<1x128xf32>
    %67 = vector.broadcast %66 : vector<1x128xf32> to vector<8x128xf32>
    %68 = arith.addf %65, %67 : vector<8x128xf32>
    %69 = vector.extract_strided_slice %7 {offsets = [0, 128], sizes = [8, 128], strides = [1, 1]} : vector<8x384xf32> to vector<8x128xf32>
    %c1 = arith.constant 1 : index
    %c0_25 = arith.constant 0 : index
    %70 = vector.load %arg5[%c1, %c0_25] : memref<16x128xf32, #tpu.memory_space<vmem>>, vector<1x128xf32>
    %71 = vector.shape_cast %70 : vector<1x128xf32> to vector<128xf32>
    %c4 = arith.constant 4 : index
    %c0_26 = arith.constant 0 : index
    %72 = vector.load %arg5[%c4, %c0_26] : memref<16x128xf32, #tpu.memory_space<vmem>>, vector<1x128xf32>
    %73 = vector.shape_cast %72 : vector<1x128xf32> to vector<128xf32>
    %cst_27 = arith.constant dense<0.000000e+00> : vector<8xf32>
    %74 = vector.multi_reduction <add>, %69, %cst_27 [1] : vector<8x128xf32> to vector<8xf32>
    %75 = vector.shape_cast %74 : vector<8xf32> to vector<8x1xf32>
    %cst_28 = arith.constant 1.280000e+02 : f32
    %76 = vector.broadcast %cst_28 : f32 to vector<8x1xf32>
    %77 = arith.divf %75, %76 : vector<8x1xf32>
    %78 = arith.mulf %69, %69 : vector<8x128xf32>
    %cst_29 = arith.constant dense<0.000000e+00> : vector<8xf32>
    %79 = vector.multi_reduction <add>, %78, %cst_29 [1] : vector<8x128xf32> to vector<8xf32>
    %80 = vector.shape_cast %79 : vector<8xf32> to vector<8x1xf32>
    %cst_30 = arith.constant 1.280000e+02 : f32
    %81 = vector.broadcast %cst_30 : f32 to vector<8x1xf32>
    %82 = arith.divf %80, %81 : vector<8x1xf32>
    %83 = arith.mulf %77, %77 : vector<8x1xf32>
    %84 = arith.subf %82, %83 : vector<8x1xf32>
    %85 = vector.broadcast %77 : vector<8x1xf32> to vector<8x128xf32>
    %86 = arith.subf %69, %85 : vector<8x128xf32>
    %cst_31 = arith.constant 1.000000e-10 : f32
    %87 = vector.broadcast %cst_31 : f32 to vector<8x1xf32>
    %88 = arith.addf %84, %87 : vector<8x1xf32>
    %89 = math.rsqrt %88 : vector<8x1xf32>
    %90 = vector.broadcast %89 : vector<8x1xf32> to vector<8x128xf32>
    %91 = arith.mulf %86, %90 : vector<8x128xf32>
    %92 = vector.shape_cast %71 : vector<128xf32> to vector<1x128xf32>
    %93 = vector.broadcast %92 : vector<1x128xf32> to vector<8x128xf32>
    %94 = arith.mulf %91, %93 : vector<8x128xf32>
    %95 = vector.shape_cast %73 : vector<128xf32> to vector<1x128xf32>
    %96 = vector.broadcast %95 : vector<1x128xf32> to vector<8x128xf32>
    %97 = arith.addf %94, %96 : vector<8x128xf32>
    %98 = vector.extract_strided_slice %10 {offsets = [0, 128], sizes = [8, 128], strides = [1, 1]} : vector<8x384xf32> to vector<8x128xf32>
    %c7 = arith.constant 7 : index
    %c0_32 = arith.constant 0 : index
    %99 = vector.load %arg5[%c7, %c0_32] : memref<16x128xf32, #tpu.memory_space<vmem>>, vector<1x128xf32>
    %100 = vector.shape_cast %99 : vector<1x128xf32> to vector<128xf32>
    %c10 = arith.constant 10 : index
    %c0_33 = arith.constant 0 : index
    %101 = vector.load %arg5[%c10, %c0_33] : memref<16x128xf32, #tpu.memory_space<vmem>>, vector<1x128xf32>
    %102 = vector.shape_cast %101 : vector<1x128xf32> to vector<128xf32>
    %cst_34 = arith.constant dense<0.000000e+00> : vector<8xf32>
    %103 = vector.multi_reduction <add>, %98, %cst_34 [1] : vector<8x128xf32> to vector<8xf32>
    %104 = vector.shape_cast %103 : vector<8xf32> to vector<8x1xf32>
    %cst_35 = arith.constant 1.280000e+02 : f32
    %105 = vector.broadcast %cst_35 : f32 to vector<8x1xf32>
    %106 = arith.divf %104, %105 : vector<8x1xf32>
    %107 = arith.mulf %98, %98 : vector<8x128xf32>
    %cst_36 = arith.constant dense<0.000000e+00> : vector<8xf32>
    %108 = vector.multi_reduction <add>, %107, %cst_36 [1] : vector<8x128xf32> to vector<8xf32>
    %109 = vector.shape_cast %108 : vector<8xf32> to vector<8x1xf32>
    %cst_37 = arith.constant 1.280000e+02 : f32
    %110 = vector.broadcast %cst_37 : f32 to vector<8x1xf32>
    %111 = arith.divf %109, %110 : vector<8x1xf32>
    %112 = arith.mulf %106, %106 : vector<8x1xf32>
    %113 = arith.subf %111, %112 : vector<8x1xf32>
    %114 = vector.broadcast %106 : vector<8x1xf32> to vector<8x128xf32>
    %115 = arith.subf %98, %114 : vector<8x128xf32>
    %cst_38 = arith.constant 1.000000e-10 : f32
    %116 = vector.broadcast %cst_38 : f32 to vector<8x1xf32>
    %117 = arith.addf %113, %116 : vector<8x1xf32>
    %118 = math.rsqrt %117 : vector<8x1xf32>
    %119 = vector.broadcast %118 : vector<8x1xf32> to vector<8x128xf32>
    %120 = arith.mulf %115, %119 : vector<8x128xf32>
    %121 = vector.shape_cast %100 : vector<128xf32> to vector<1x128xf32>
    %122 = vector.broadcast %121 : vector<1x128xf32> to vector<8x128xf32>
    %123 = arith.mulf %120, %122 : vector<8x128xf32>
    %124 = vector.shape_cast %102 : vector<128xf32> to vector<1x128xf32>
    %125 = vector.broadcast %124 : vector<1x128xf32> to vector<8x128xf32>
    %126 = arith.addf %123, %125 : vector<8x128xf32>
    %127 = vector.extract_strided_slice %7 {offsets = [0, 256], sizes = [8, 128], strides = [1, 1]} : vector<8x384xf32> to vector<8x128xf32>
    %c2 = arith.constant 2 : index
    %c0_39 = arith.constant 0 : index
    %128 = vector.load %arg5[%c2, %c0_39] : memref<16x128xf32, #tpu.memory_space<vmem>>, vector<1x128xf32>
    %129 = vector.shape_cast %128 : vector<1x128xf32> to vector<128xf32>
    %c5 = arith.constant 5 : index
    %c0_40 = arith.constant 0 : index
    %130 = vector.load %arg5[%c5, %c0_40] : memref<16x128xf32, #tpu.memory_space<vmem>>, vector<1x128xf32>
    %131 = vector.shape_cast %130 : vector<1x128xf32> to vector<128xf32>
    %cst_41 = arith.constant dense<0.000000e+00> : vector<8xf32>
    %132 = vector.multi_reduction <add>, %127, %cst_41 [1] : vector<8x128xf32> to vector<8xf32>
    %133 = vector.shape_cast %132 : vector<8xf32> to vector<8x1xf32>
    %cst_42 = arith.constant 1.280000e+02 : f32
    %134 = vector.broadcast %cst_42 : f32 to vector<8x1xf32>
    %135 = arith.divf %133, %134 : vector<8x1xf32>
    %136 = arith.mulf %127, %127 : vector<8x128xf32>
    %cst_43 = arith.constant dense<0.000000e+00> : vector<8xf32>
    %137 = vector.multi_reduction <add>, %136, %cst_43 [1] : vector<8x128xf32> to vector<8xf32>
    %138 = vector.shape_cast %137 : vector<8xf32> to vector<8x1xf32>
    %cst_44 = arith.constant 1.280000e+02 : f32
    %139 = vector.broadcast %cst_44 : f32 to vector<8x1xf32>
    %140 = arith.divf %138, %139 : vector<8x1xf32>
    %141 = arith.mulf %135, %135 : vector<8x1xf32>
    %142 = arith.subf %140, %141 : vector<8x1xf32>
    %143 = vector.broadcast %135 : vector<8x1xf32> to vector<8x128xf32>
    %144 = arith.subf %127, %143 : vector<8x128xf32>
    %cst_45 = arith.constant 1.000000e-10 : f32
    %145 = vector.broadcast %cst_45 : f32 to vector<8x1xf32>
    %146 = arith.addf %142, %145 : vector<8x1xf32>
    %147 = math.rsqrt %146 : vector<8x1xf32>
    %148 = vector.broadcast %147 : vector<8x1xf32> to vector<8x128xf32>
    %149 = arith.mulf %144, %148 : vector<8x128xf32>
    %150 = vector.shape_cast %129 : vector<128xf32> to vector<1x128xf32>
    %151 = vector.broadcast %150 : vector<1x128xf32> to vector<8x128xf32>
    %152 = arith.mulf %149, %151 : vector<8x128xf32>
    %153 = vector.shape_cast %131 : vector<128xf32> to vector<1x128xf32>
    %154 = vector.broadcast %153 : vector<1x128xf32> to vector<8x128xf32>
    %155 = arith.addf %152, %154 : vector<8x128xf32>
    %156 = vector.extract_strided_slice %10 {offsets = [0, 256], sizes = [8, 128], strides = [1, 1]} : vector<8x384xf32> to vector<8x128xf32>
    %c8 = arith.constant 8 : index
    %c0_46 = arith.constant 0 : index
    %157 = vector.load %arg5[%c8, %c0_46] : memref<16x128xf32, #tpu.memory_space<vmem>>, vector<1x128xf32>
    %158 = vector.shape_cast %157 : vector<1x128xf32> to vector<128xf32>
    %c11 = arith.constant 11 : index
    %c0_47 = arith.constant 0 : index
    %159 = vector.load %arg5[%c11, %c0_47] : memref<16x128xf32, #tpu.memory_space<vmem>>, vector<1x128xf32>
    %160 = vector.shape_cast %159 : vector<1x128xf32> to vector<128xf32>
    %cst_48 = arith.constant dense<0.000000e+00> : vector<8xf32>
    %161 = vector.multi_reduction <add>, %156, %cst_48 [1] : vector<8x128xf32> to vector<8xf32>
    %162 = vector.shape_cast %161 : vector<8xf32> to vector<8x1xf32>
    %cst_49 = arith.constant 1.280000e+02 : f32
    %163 = vector.broadcast %cst_49 : f32 to vector<8x1xf32>
    %164 = arith.divf %162, %163 : vector<8x1xf32>
    %165 = arith.mulf %156, %156 : vector<8x128xf32>
    %cst_50 = arith.constant dense<0.000000e+00> : vector<8xf32>
    %166 = vector.multi_reduction <add>, %165, %cst_50 [1] : vector<8x128xf32> to vector<8xf32>
    %167 = vector.shape_cast %166 : vector<8xf32> to vector<8x1xf32>
    %cst_51 = arith.constant 1.280000e+02 : f32
    %168 = vector.broadcast %cst_51 : f32 to vector<8x1xf32>
    %169 = arith.divf %167, %168 : vector<8x1xf32>
    %170 = arith.mulf %164, %164 : vector<8x1xf32>
    %171 = arith.subf %169, %170 : vector<8x1xf32>
    %172 = vector.broadcast %164 : vector<8x1xf32> to vector<8x128xf32>
    %173 = arith.subf %156, %172 : vector<8x128xf32>
    %cst_52 = arith.constant 1.000000e-10 : f32
    %174 = vector.broadcast %cst_52 : f32 to vector<8x1xf32>
    %175 = arith.addf %171, %174 : vector<8x1xf32>
    %176 = math.rsqrt %175 : vector<8x1xf32>
    %177 = vector.broadcast %176 : vector<8x1xf32> to vector<8x128xf32>
    %178 = arith.mulf %173, %177 : vector<8x128xf32>
    %179 = vector.shape_cast %158 : vector<128xf32> to vector<1x128xf32>
    %180 = vector.broadcast %179 : vector<1x128xf32> to vector<8x128xf32>
    %181 = arith.mulf %178, %180 : vector<8x128xf32>
    %182 = vector.shape_cast %160 : vector<128xf32> to vector<1x128xf32>
    %183 = vector.broadcast %182 : vector<1x128xf32> to vector<8x128xf32>
    %184 = arith.addf %181, %183 : vector<8x128xf32>
    %c12 = arith.constant 12 : index
    %c0_53 = arith.constant 0 : index
    %185 = vector.load %arg5[%c12, %c0_53] : memref<16x128xf32, #tpu.memory_space<vmem>>, vector<1x128xf32>
    %186 = vector.shape_cast %185 : vector<1x128xf32> to vector<128xf32>
    %c13 = arith.constant 13 : index
    %c0_54 = arith.constant 0 : index
    %187 = vector.load %arg5[%c13, %c0_54] : memref<16x128xf32, #tpu.memory_space<vmem>>, vector<1x128xf32>
    %188 = vector.shape_cast %187 : vector<1x128xf32> to vector<128xf32>
    %c14 = arith.constant 14 : index
    %c0_55 = arith.constant 0 : index
    %189 = vector.load %arg5[%c14, %c0_55] : memref<16x128xf32, #tpu.memory_space<vmem>>, vector<1x128xf32>
    %190 = vector.shape_cast %189 : vector<1x128xf32> to vector<128xf32>
    %c15 = arith.constant 15 : index
    %c0_56 = arith.constant 0 : index
    %191 = vector.load %arg5[%c15, %c0_56] : memref<16x128xf32, #tpu.memory_space<vmem>>, vector<1x128xf32>
    %192 = vector.shape_cast %191 : vector<1x128xf32> to vector<128xf32>
    %193 = arith.addf %39, %68 : vector<8x128xf32>
    %194 = vector.shape_cast %186 : vector<128xf32> to vector<1x128xf32>
    %195 = vector.broadcast %194 : vector<1x128xf32> to vector<8x128xf32>
    %196 = arith.addf %193, %195 : vector<8x128xf32>
    %197 = arith.negf %196 : vector<8x128xf32>
    %198 = math.exp %197 : vector<8x128xf32>
    %cst_57 = arith.constant 1.000000e+00 : f32
    %199 = vector.broadcast %cst_57 : f32 to vector<8x128xf32>
    %200 = arith.addf %199, %198 : vector<8x128xf32>
    %201 = arith.divf %199, %200 : vector<8x128xf32>
    %202 = arith.addf %97, %126 : vector<8x128xf32>
    %203 = vector.shape_cast %188 : vector<128xf32> to vector<1x128xf32>
    %204 = vector.broadcast %203 : vector<1x128xf32> to vector<8x128xf32>
    %205 = arith.addf %202, %204 : vector<8x128xf32>
    %206 = arith.negf %205 : vector<8x128xf32>
    %207 = math.exp %206 : vector<8x128xf32>
    %cst_58 = arith.constant 1.000000e+00 : f32
    %208 = vector.broadcast %cst_58 : f32 to vector<8x128xf32>
    %209 = arith.addf %208, %207 : vector<8x128xf32>
    %210 = arith.divf %208, %209 : vector<8x128xf32>
    %211 = vector.shape_cast %190 : vector<128xf32> to vector<1x128xf32>
    %212 = vector.broadcast %211 : vector<1x128xf32> to vector<8x128xf32>
    %213 = arith.addf %155, %212 : vector<8x128xf32>
    %214 = vector.shape_cast %192 : vector<128xf32> to vector<1x128xf32>
    %215 = vector.broadcast %214 : vector<1x128xf32> to vector<8x128xf32>
    %216 = arith.addf %184, %215 : vector<8x128xf32>
    %217 = arith.mulf %201, %216 : vector<8x128xf32>
    %218 = arith.addf %213, %217 : vector<8x128xf32>
    %219 = math.tanh %218 : vector<8x128xf32>
    %cst_59 = arith.constant 1.000000e+00 : f32
    %220 = vector.broadcast %cst_59 : f32 to vector<8x128xf32>
    %221 = arith.subf %220, %210 : vector<8x128xf32>
    %222 = arith.mulf %221, %219 : vector<8x128xf32>
    %223 = arith.mulf %210, %3 : vector<8x128xf32>
    %224 = arith.addf %222, %223 : vector<8x128xf32>
    %c0_60 = arith.constant 0 : index
    %c0_61 = arith.constant 0 : index
    %225 = vector.load %arg7[%c0_60, %c0_61] : memref<8x128xf32, #tpu.memory_space<vmem>>, vector<8x128xf32>
    tpu.vector_store %arg7[%c0_60, %c0_61], %224 {strides = array<i32>} : memref<8x128xf32, #tpu.memory_space<vmem>>, vector<8x128xf32>,
    %c0_62 = arith.constant 0 : index
    %c0_63 = arith.constant 0 : index
    %c0_64 = arith.constant 0 : index
    %226 = vector.load %arg6[%c0_62, %c0_63, %c0_64] : memref<1x8x128xf32, #tpu.memory_space<vmem>>, vector<1x8x128xf32>
    %227 = vector.shape_cast %226 : vector<1x8x128xf32> to vector<8x128xf32>
    %228 = vector.shape_cast %224 : vector<8x128xf32> to vector<1x8x128xf32>
    tpu.vector_store %arg6[%c0_62, %c0_63, %c0_64], %228 {strides = array<i32>} : memref<1x8x128xf32, #tpu.memory_space<vmem>>, vector<1x8x128xf32>,
    return
  }
  func.func @transform_0(%arg0: i32) -> (i32, i32, i32) {
    %c0_i32 = arith.constant 0 : i32
    %c0_i32_0 = arith.constant 0 : i32
    %c0_i32_1 = arith.constant 0 : i32
    return %arg0, %c0_i32, %c0_i32_0 : i32, i32, i32
  }
  func.func @transform_1(%arg0: i32) -> (i32, i32) {
    %c0_i32 = arith.constant 0 : i32
    %c0_i32_0 = arith.constant 0 : i32
    %c0_i32_1 = arith.constant 0 : i32
    return %c0_i32, %c0_i32_0 : i32, i32
  }
  func.func @transform_2(%arg0: i32) -> (i32, i32) {
    %c0_i32 = arith.constant 0 : i32
    %c0_i32_0 = arith.constant 0 : i32
    %c0_i32_1 = arith.constant 0 : i32
    return %c0_i32, %c0_i32_0 : i32, i32
  }
  func.func @transform_3(%arg0: i32) -> (i32, i32) {
    %c0_i32 = arith.constant 0 : i32
    %c0_i32_0 = arith.constant 0 : i32
    %c0_i32_1 = arith.constant 0 : i32
    return %c0_i32, %c0_i32_0 : i32, i32
  }
  func.func @transform_4(%arg0: i32) -> (i32, i32) {
    %c0_i32 = arith.constant 0 : i32
    %c0_i32_0 = arith.constant 0 : i32
    %c0_i32_1 = arith.constant 0 : i32
    return %c0_i32, %c0_i32_0 : i32, i32
  }
  func.func @transform_5(%arg0: i32) -> (i32, i32, i32) {
    %c0_i32 = arith.constant 0 : i32
    %c0_i32_0 = arith.constant 0 : i32
    %c0_i32_1 = arith.constant 0 : i32
    return %arg0, %c0_i32, %c0_i32_0 : i32, i32, i32
  }
}

</mosaic_0001>

<llo_original>
// kernel: tpu_custom_call.1
$region0: #{tpu_custom_call.1}
  #allocation0 [shape = 'u32[]', space=smem, size = 0x4, offset = 0x4, fixed_abs, tag = 'smem constant byte address 0x4 - core index']
  #allocation1 [shape = 'u32[144,128]{1,0:T(1,128)}', space=vmem, size = 0x12000, scoped, tag = 'internal scratch']
  #allocation2 [shape = 'f32[8,128]{1,0:T(8,128)}', space=vmem, size = 0x1000, scoped, tag = 'scratch operand']
  %s0 = inlined_call_operand.hbm [shape: bf16[1,8,64], index: 0, kind: input, shape index: {}]
  %s1 = inlined_call_operand.hbm [shape: f32[8,128], index: 1, kind: input, shape index: {}]
  %s2 = inlined_call_operand.hbm [shape: bf16[64,384], index: 2, kind: input, shape index: {}]
  %s3 = inlined_call_operand.hbm [shape: bf16[128,384], index: 3, kind: input, shape index: {}]
  %s4 = inlined_call_operand.hbm [shape: f32[16,128], index: 4, kind: input, shape index: {}]
  %s5 = inlined_call_operand.hbm [shape: f32[1,8,128], index: 5, kind: output, shape index: {}]
  %s6 = sld [smem:[#allocation0]]
  $region54: #{tpu_custom_call.1} parent=0
    _
  %s8 = ssub.s32 1, %s6
  %s9 = scalar_select 0, %s8, %s6
  $region1: #{tpu_custom_call.1} parent=0
    #allocation3 [shape = 'u8[2048]{0}', space=vmem, size = 0x800, scoped, tag = 'input window, operand 0, single buffered']
    #allocation4 [shape = 's32[1]{0}', space=sflag, size = 0x4, scoped, tag = 'scoped memory for tpu_custom_call.1']
    #allocation5 [shape = 's32[1]{0}', space=sflag, size = 0x4, scoped, tag = 'scoped memory for tpu_custom_call.1']
    #allocation6 [shape = 'u8[4096]{0}', space=vmem, size = 0x1000, scoped, tag = 'input window, operand 1, single buffered']
    #allocation7 [shape = 's32[1]{0}', space=sflag, size = 0x4, scoped, tag = 'scoped memory for tpu_custom_call.1']
    #allocation8 [shape = 'u8[49152]{0}', space=vmem, size = 0xc000, scoped, tag = 'input window, operand 2, single buffered']
    #allocation9 [shape = 'u8[98304]{0}', space=vmem, size = 0x18000, scoped, tag = 'input window, operand 3, single buffered']
    #allocation10 [shape = 's32[1]{0}', space=sflag, size = 0x4, scoped, tag = 'scoped memory for tpu_custom_call.1']
    #allocation11 [shape = 'u8[8192]{0}', space=vmem, size = 0x2000, scoped, tag = 'input window, operand 4, single buffered']
    #allocation12 [shape = 'u8[4096]{0}', space=vmem, size = 0x1000, scoped, tag = 'output window, operand 0, single buffered']
    %10 = vsyncpa [#allocation4], 0
    %11 = vsyncpa [#allocation7], 0
    %12 = vsyncpa [#allocation10], 0
    %13 = vsyncpa [#allocation5], 0
    // Predicated region
    $region2: #{tpu_custom_call.1} parent=1 // pred_check
      _
    $region3: #{tpu_custom_call.1} parent=1 // pred_check_branch
      %15 = sbr.rel (0) target = $region5
    $region4: #{tpu_custom_call.1} parent=1 // pred_region
      %s17 = ssub.s32 64, 64
      %18 = vsyncadd [#allocation4], %s17
      %s20 = sshll.u32 [#allocation3], 4
      %s21 = int_to_ptr.vmem [resolvable:$true] %s20
      %23 = dma.hbm_to_vmem [thread:$0]  %s0, 64, %s21, [#allocation4]
    $region5: #{tpu_custom_call.1} parent=1 // pred_fallthru
      _
    // Predicated region
    $region6: #{tpu_custom_call.1} parent=1 // pred_check
      _
    $region7: #{tpu_custom_call.1} parent=1 // pred_check_branch
      %25 = sbr.rel (0) target = $region9
    $region8: #{tpu_custom_call.1} parent=1 // pred_region
      %s27 = ssub.s32 128, 128
      %28 = vsyncadd [#allocation7], %s27
      %s30 = sshll.u32 [#allocation6], 4
      %s31 = int_to_ptr.vmem [resolvable:$true] %s30
      %33 = dma.hbm_to_vmem [thread:$0]  %s1, 128, %s31, [#allocation7]
    $region9: #{tpu_custom_call.1} parent=1 // pred_fallthru
      _
    // Predicated region
    $region10: #{tpu_custom_call.1} parent=1 // pred_check
      _
    $region11: #{tpu_custom_call.1} parent=1 // pred_check_branch
      %35 = sbr.rel (0) target = $region13
    $region12: #{tpu_custom_call.1} parent=1 // pred_region
      %s37 = ssub.s32 1536, 1536
      %38 = vsyncadd [#allocation7], %s37
      %s39 = sshll.u32 [#allocation8], 4
      %s40 = int_to_ptr.vmem [resolvable:$true] %s39
      %45 = dma.hbm_to_vmem [thread:$0]  %s2, 1536, %s40, [#allocation7], 192, 192, 12
    $region13: #{tpu_custom_call.1} parent=1 // pred_fallthru
      _
    // Predicated region
    $region14: #{tpu_custom_call.1} parent=1 // pred_check
      _
    $region15: #{tpu_custom_call.1} parent=1 // pred_check_branch
      %47 = sbr.rel (0) target = $region17
    $region16: #{tpu_custom_call.1} parent=1 // pred_region
      %s49 = ssub.s32 3072, 3072
      %50 = vsyncadd [#allocation10], %s49
      %s51 = sshll.u32 [#allocation9], 4
      %s52 = int_to_ptr.vmem [resolvable:$true] %s51
      %57 = dma.hbm_to_vmem [thread:$0]  %s3, 3072, %s52, [#allocation10], 192, 192, 12
    $region17: #{tpu_custom_call.1} parent=1 // pred_fallthru
      _
    // Predicated region
    $region18: #{tpu_custom_call.1} parent=1 // pred_check
      _
    $region19: #{tpu_custom_call.1} parent=1 // pred_check_branch
      %59 = sbr.rel (0) target = $region21
    $region20: #{tpu_custom_call.1} parent=1 // pred_region
      %s61 = ssub.s32 256, 256
      %62 = vsyncadd [#allocation10], %s61
      %s63 = sshll.u32 [#allocation11], 4
      %s64 = int_to_ptr.vmem [resolvable:$true] %s63
      %69 = dma.hbm_to_vmem [thread:$0]  %s4, 256, %s64, [#allocation10], 128, 128, 8
    $region21: #{tpu_custom_call.1} parent=1 // pred_fallthru
      _
    // Predicated region
    $region22: #{tpu_custom_call.1} parent=1 // pred_check
      _
    $region23: #{tpu_custom_call.1} parent=1 // pred_check_branch
      %71 = sbr.rel (0) target = $region25
    $region24: #{tpu_custom_call.1} parent=1 // pred_region
      %72 = dma.done [#allocation4], 64
    $region25: #{tpu_custom_call.1} parent=1 // pred_fallthru
      _
    // Predicated region
    $region26: #{tpu_custom_call.1} parent=1 // pred_check
      _
    $region27: #{tpu_custom_call.1} parent=1 // pred_check_branch
      %74 = sbr.rel (0) target = $region29
    $region28: #{tpu_custom_call.1} parent=1 // pred_region
      %75 = dma.done [#allocation7], 128
    $region29: #{tpu_custom_call.1} parent=1 // pred_fallthru
      _
    // Predicated region
    $region30: #{tpu_custom_call.1} parent=1 // pred_check
      _
    $region31: #{tpu_custom_call.1} parent=1 // pred_check_branch
      %77 = sbr.rel (0) target = $region33
    $region32: #{tpu_custom_call.1} parent=1 // pred_region
      %78 = dma.done [#allocation7], 1536
    $region33: #{tpu_custom_call.1} parent=1 // pred_fallthru
      _
    // Predicated region
    $region34: #{tpu_custom_call.1} parent=1 // pred_check
      _
    $region35: #{tpu_custom_call.1} parent=1 // pred_check_branch
      %80 = sbr.rel (0) target = $region37
    $region36: #{tpu_custom_call.1} parent=1 // pred_region
      %81 = dma.done [#allocation10], 3072
    $region37: #{tpu_custom_call.1} parent=1 // pred_fallthru
      _
    // Predicated region
    $region38: #{tpu_custom_call.1} parent=1 // pred_check
      _
    $region39: #{tpu_custom_call.1} parent=1 // pred_check_branch
      %83 = sbr.rel (0) target = $region41
    $region40: #{tpu_custom_call.1} parent=1 // pred_region
      %84 = dma.done [#allocation10], 256
    $region41: #{tpu_custom_call.1} parent=1 // pred_fallthru
      _
    %p86 = scmp.eq.s32.totalorder 0, 0
    // Predicated region
    $region42: #{tpu_custom_call.1} parent=1 // pred_check
      %p87 = pneg %p86
    $region43: #{tpu_custom_call.1} parent=1 // pred_check_branch
      %89 = sbr.rel (%p87) target = $region45
    $region44: #{tpu_custom_call.1} parent=1 // pred_region
      %v90 = vld [vmem:[#allocation6] sm:$0xff]
      %91 = vst [vmem:[#allocation2] sm:$0xff] %v90
    $region45: #{tpu_custom_call.1} parent=1 // pred_fallthru
      _
    %v92 = vld [vmem:[#allocation2] sm:$0xff]
    %v93 = vld [vmem:[#allocation3] sm:$0xf]
    %v94 = vld [vmem:[#allocation8] sm:$0xff]
    %v95 = vld [vmem:[#allocation8 + $0x8] sm:$0xf]
    %v96 = vld [vmem:[#allocation8 + $0xc] sm:$0xff]
    %v97 = vld [vmem:[#allocation8 + $0x14] sm:$0xf]
    %v98 = vld [vmem:[#allocation8 + $0x18] sm:$0xff]
    %v99 = vld [vmem:[#allocation8 + $0x20] sm:$0xf]
    %v100 = vld [vmem:[#allocation8 + $0x24] sm:$0xff]
    %v101 = vld [vmem:[#allocation8 + $0x2c] sm:$0xf]
    %v102 = vld [vmem:[#allocation8 + $0x30] sm:$0xff]
    %v103 = vld [vmem:[#allocation8 + $0x38] sm:$0xf]
    %v104 = vld [vmem:[#allocation8 + $0x3c] sm:$0xff]
    %v105 = vld [vmem:[#allocation8 + $0x44] sm:$0xf]
    %v106 = vld [vmem:[#allocation8 + $0x48] sm:$0xff]
    %v107 = vld [vmem:[#allocation8 + $0x50] sm:$0xf]
    %v108 = vld [vmem:[#allocation8 + $0x54] sm:$0xff]
    %v109 = vld [vmem:[#allocation8 + $0x5c] sm:$0xf]
    %v126 = vunpack.c.l.b16 %v94
    %v127 = vunpack.c.h.b16 %v94
    %v128 = vunpack.c.l.b16 %v95
    %v129 = vunpack.c.l.b16 %v96
    %v130 = vunpack.c.h.b16 %v96
    %v131 = vunpack.c.l.b16 %v97
    %v132 = vunpack.c.l.b16 %v98
    %v133 = vunpack.c.h.b16 %v98
    %v134 = vunpack.c.l.b16 %v99
    %v135 = vunpack.c.l.b16 %v100
    %v136 = vunpack.c.h.b16 %v100
    %v137 = vunpack.c.l.b16 %v101
    %v138 = vunpack.c.l.b16 %v102
    %v139 = vunpack.c.h.b16 %v102
    %v140 = vunpack.c.l.b16 %v103
    %v141 = vunpack.c.l.b16 %v104
    %v142 = vunpack.c.h.b16 %v104
    %v143 = vunpack.c.l.b16 %v105
    %v144 = vunpack.c.l.b16 %v106
    %v145 = vunpack.c.h.b16 %v106
    %v146 = vunpack.c.l.b16 %v107
    %v147 = vunpack.c.l.b16 %v108
    %v148 = vunpack.c.h.b16 %v108
    %v149 = vunpack.c.l.b16 %v109
    %v150 = vpack.c.b16 %v129, %v126
    %v151 = vpack.c.b16 %v130, %v127
    %v152 = vpack.c.b16 %v131, %v128
    %v153 = vpack.c.b16 %v135, %v132
    %v154 = vpack.c.b16 %v136, %v133
    %v155 = vpack.c.b16 %v137, %v134
    %v156 = vpack.c.b16 %v141, %v138
    %v157 = vpack.c.b16 %v142, %v139
    %v158 = vpack.c.b16 %v143, %v140
    %v159 = vpack.c.b16 %v147, %v144
    %v160 = vpack.c.b16 %v148, %v145
    %v161 = vpack.c.b16 %v149, %v146
    %vm174 = vcmask 523264
    %v176 = vsel %vm174, %v93, 0
    %178 = vmatprep.subr.bf16.mxu0 0
    %179 = vmatpush1.bf16.msra.mxu0 0
    %180 = vmatprep.subr.bf16.mxu0 0
    %181 = vmatpush1.bf16.msra.mxu0 0
    %182 = vmatprep.subr.bf16.mxu0 0
    %183 = vmatpush1.bf16.msra.mxu0 0
    %184 = vmatprep.subr.bf16.mxu0 0
    %185 = vmatpush1.bf16.msra.mxu0 0
    %186 = vmatprep.subr.bf16.mxu0 %v160
    %187 = vmatpush1.bf16.msra.mxu0 %v159
    %188 = vmatprep.subr.bf16.mxu0 %v157
    %189 = vmatpush1.bf16.msra.mxu0 %v156
    %190 = vmatprep.subr.bf16.mxu0 %v154
    %191 = vmatpush1.bf16.msra.mxu0 %v153
    %192 = vmatprep.subr.bf16.mxu0 %v151
    %193 = vmatpush1.bf16.msra.mxu0 %v150
    %194 = vmatprep.subr.bf16.mxu0 0
    %195 = vmatpush2.bf16.msra.mxu0 0
    %196 = vmatprep.subr.bf16.mxu0 0
    %197 = vmatpush2.bf16.msra.mxu0 0
    %198 = vmatprep.subr.bf16.mxu0 0
    %199 = vmatpush2.bf16.msra.mxu0 0
    %200 = vmatprep.subr.bf16.mxu0 0
    %201 = vmatpush2.bf16.msra.mxu0 0
    %202 = vmatprep.subr.bf16.mxu0 0
    %203 = vmatpush2.bf16.msra.mxu0 0
    %204 = vmatprep.subr.bf16.mxu0 0
    %205 = vmatpush2.bf16.msra.mxu0 0
    %206 = vmatprep.subr.bf16.mxu0 0
    %207 = vmatpush2.bf16.msra.mxu0 0
    %208 = vmatprep.subr.bf16.mxu0 0
    %209 = vmatpush2.bf16.msra.mxu0 0
    %210 = vmatprep.mubr.bf16.mxu0 0
    %211 = vmatmul.mubr.bf16.gmra.mxu0 %v176
    %v212 = vpop.f32.mrf.mxu0
    %v213 = vadd.f32 0.0, %v212
    %v214 = vpop.f32.mrf.mxu0
    %v215 = vadd.f32 0.0, %v214
    %v216 = vpop.f32.mrf.mxu0
    %v217 = vpop.f32.mrf.mxu0
    %218 = vdwg.mxu0
    %219 = vmatprep.subr.bf16.mxu0 0
    %220 = vmatpush1.bf16.msra.mxu0 0
    %221 = vmatprep.subr.bf16.mxu0 0
    %222 = vmatpush1.bf16.msra.mxu0 0
    %223 = vmatprep.subr.bf16.mxu0 0
    %224 = vmatpush1.bf16.msra.mxu0 0
    %225 = vmatprep.subr.bf16.mxu0 0
    %226 = vmatpush1.bf16.msra.mxu0 0
    %227 = vmatprep.subr.bf16.mxu0 0
    %228 = vmatpush1.bf16.msra.mxu0 %v161
    %229 = vmatprep.subr.bf16.mxu0 0
    %230 = vmatpush1.bf16.msra.mxu0 %v158
    %231 = vmatprep.subr.bf16.mxu0 0
    %232 = vmatpush1.bf16.msra.mxu0 %v155
    %233 = vmatprep.subr.bf16.mxu0 0
    %234 = vmatpush1.bf16.msra.mxu0 %v152
    %235 = vmatprep.subr.bf16.mxu0 0
    %236 = vmatpush2.bf16.msra.mxu0 0
    %237 = vmatprep.subr.bf16.mxu0 0
    %238 = vmatpush2.bf16.msra.mxu0 0
    %239 = vmatprep.subr.bf16.mxu0 0
    %240 = vmatpush2.bf16.msra.mxu0 0
    %241 = vmatprep.subr.bf16.mxu0 0
    %242 = vmatpush2.bf16.msra.mxu0 0
    %243 = vmatprep.subr.bf16.mxu0 0
    %244 = vmatpush2.bf16.msra.mxu0 0
    %245 = vmatprep.subr.bf16.mxu0 0
    %246 = vmatpush2.bf16.msra.mxu0 0
    %247 = vmatprep.subr.bf16.mxu0 0
    %248 = vmatpush2.bf16.msra.mxu0 0
    %249 = vmatprep.subr.bf16.mxu0 0
    %250 = vmatpush2.bf16.msra.mxu0 0
    %251 = vmatprep.mubr.bf16.mxu0 0
    %252 = vmatmul.mubr.bf16.gmra.mxu0 %v176
    %v253 = vpop.f32.mrf.mxu0
    %v254 = vadd.f32 0.0, %v253
    %v255 = vpop.f32.mrf.mxu0
    %v256 = vpop.f32.mrf.mxu0
    %v257 = vpop.f32.mrf.mxu0
    %258 = vdwg.mxu0
    %v259 = vpack.c.bf16 %v92, %v92
    %v260 = vld [vmem:[#allocation9] sm:$0xff]
    %v261 = vld [vmem:[#allocation9 + $0x8] sm:$0xf]
    %v262 = vld [vmem:[#allocation9 + $0xc] sm:$0xff]
    %v263 = vld [vmem:[#allocation9 + $0x14] sm:$0xf]
    %v264 = vld [vmem:[#allocation9 + $0x18] sm:$0xff]
    %v265 = vld [vmem:[#allocation9 + $0x20] sm:$0xf]
    %v266 = vld [vmem:[#allocation9 + $0x24] sm:$0xff]
    %v267 = vld [vmem:[#allocation9 + $0x2c] sm:$0xf]
    %v268 = vld [vmem:[#allocation9 + $0x30] sm:$0xff]
    %v269 = vld [vmem:[#allocation9 + $0x38] sm:$0xf]
    %v270 = vld [vmem:[#allocation9 + $0x3c] sm:$0xff]
    %v271 = vld [vmem:[#allocation9 + $0x44] sm:$0xf]
    %v272 = vld [vmem:[#allocation9 + $0x48] sm:$0xff]
    %v273 = vld [vmem:[#allocation9 + $0x50] sm:$0xf]
    %v274 = vld [vmem:[#allocation9 + $0x54] sm:$0xff]
    %v275 = vld [vmem:[#allocation9 + $0x5c] sm:$0xf]
    %v276 = vld [vmem:[#allocation9 + $0x60] sm:$0xff]
    %v277 = vld [vmem:[#allocation9 + $0x68] sm:$0xf]
    %v278 = vld [vmem:[#allocation9 + $0x6c] sm:$0xff]
    %v279 = vld [vmem:[#allocation9 + $0x74] sm:$0xf]
    %v280 = vld [vmem:[#allocation9 + $0x78] sm:$0xff]
    %v281 = vld [vmem:[#allocation9 + $0x80] sm:$0xf]
    %v282 = vld [vmem:[#allocation9 + $0x84] sm:$0xff]
    %v283 = vld [vmem:[#allocation9 + $0x8c] sm:$0xf]
    %v284 = vld [vmem:[#allocation9 + $0x90] sm:$0xff]
    %v285 = vld [vmem:[#allocation9 + $0x98] sm:$0xf]
    %v286 = vld [vmem:[#allocation9 + $0x9c] sm:$0xff]
    %v287 = vld [vmem:[#allocation9 + $0xa4] sm:$0xf]
    %v288 = vld [vmem:[#allocation9 + $0xa8] sm:$0xff]
    %v289 = vld [vmem:[#allocation9 + $0xb0] sm:$0xf]
    %v290 = vld [vmem:[#allocation9 + $0xb4] sm:$0xff]
    %v291 = vld [vmem:[#allocation9 + $0xbc] sm:$0xf]
    %v324 = vunpack.c.l.b16 %v260
    %v325 = vunpack.c.h.b16 %v260
    %v326 = vunpack.c.l.b16 %v261
    %v327 = vunpack.c.l.b16 %v262
    %v328 = vunpack.c.h.b16 %v262
    %v329 = vunpack.c.l.b16 %v263
    %v330 = vunpack.c.l.b16 %v264
    %v331 = vunpack.c.h.b16 %v264
    %v332 = vunpack.c.l.b16 %v265
    %v333 = vunpack.c.l.b16 %v266
    %v334 = vunpack.c.h.b16 %v266
    %v335 = vunpack.c.l.b16 %v267
    %v336 = vunpack.c.l.b16 %v268
    %v337 = vunpack.c.h.b16 %v268
    %v338 = vunpack.c.l.b16 %v269
    %v339 = vunpack.c.l.b16 %v270
    %v340 = vunpack.c.h.b16 %v270
    %v341 = vunpack.c.l.b16 %v271
    %v342 = vunpack.c.l.b16 %v272
    %v343 = vunpack.c.h.b16 %v272
    %v344 = vunpack.c.l.b16 %v273
    %v345 = vunpack.c.l.b16 %v274
    %v346 = vunpack.c.h.b16 %v274
    %v347 = vunpack.c.l.b16 %v275
    %v348 = vunpack.c.l.b16 %v276
    %v349 = vunpack.c.h.b16 %v276
    %v350 = vunpack.c.l.b16 %v277
    %v351 = vunpack.c.l.b16 %v278
    %v352 = vunpack.c.h.b16 %v278
    %v353 = vunpack.c.l.b16 %v279
    %v354 = vunpack.c.l.b16 %v280
    %v355 = vunpack.c.h.b16 %v280
    %v356 = vunpack.c.l.b16 %v281
    %v357 = vunpack.c.l.b16 %v282
    %v358 = vunpack.c.h.b16 %v282
    %v359 = vunpack.c.l.b16 %v283
    %v360 = vunpack.c.l.b16 %v284
    %v361 = vunpack.c.h.b16 %v284
    %v362 = vunpack.c.l.b16 %v285
    %v363 = vunpack.c.l.b16 %v286
    %v364 = vunpack.c.h.b16 %v286
    %v365 = vunpack.c.l.b16 %v287
    %v366 = vunpack.c.l.b16 %v288
    %v367 = vunpack.c.h.b16 %v288
    %v368 = vunpack.c.l.b16 %v289
    %v369 = vunpack.c.l.b16 %v290
    %v370 = vunpack.c.h.b16 %v290
    %v371 = vunpack.c.l.b16 %v291
    %v372 = vpack.c.b16 %v327, %v324
    %v373 = vpack.c.b16 %v328, %v325
    %v374 = vpack.c.b16 %v329, %v326
    %v375 = vpack.c.b16 %v333, %v330
    %v376 = vpack.c.b16 %v334, %v331
    %v377 = vpack.c.b16 %v335, %v332
    %v378 = vpack.c.b16 %v339, %v336
    %v379 = vpack.c.b16 %v340, %v337
    %v380 = vpack.c.b16 %v341, %v338
    %v381 = vpack.c.b16 %v345, %v342
    %v382 = vpack.c.b16 %v346, %v343
    %v383 = vpack.c.b16 %v347, %v344
    %v384 = vpack.c.b16 %v351, %v348
    %v385 = vpack.c.b16 %v352, %v349
    %v386 = vpack.c.b16 %v353, %v350
    %v387 = vpack.c.b16 %v357, %v354
    %v388 = vpack.c.b16 %v358, %v355
    %v389 = vpack.c.b16 %v359, %v356
    %v390 = vpack.c.b16 %v363, %v360
    %v391 = vpack.c.b16 %v364, %v361
    %v392 = vpack.c.b16 %v365, %v362
    %v393 = vpack.c.b16 %v369, %v366
    %v394 = vpack.c.b16 %v370, %v367
    %v395 = vpack.c.b16 %v371, %v368
    %420 = vmatprep.subr.bf16.mxu0 %v394
    %421 = vmatpush1.bf16.msra.mxu0 %v393
    %422 = vmatprep.subr.bf16.mxu0 %v391
    %423 = vmatpush1.bf16.msra.mxu0 %v390
    %424 = vmatprep.subr.bf16.mxu0 %v388
    %425 = vmatpush1.bf16.msra.mxu0 %v387
    %426 = vmatprep.subr.bf16.mxu0 %v385
    %427 = vmatpush1.bf16.msra.mxu0 %v384
    %428 = vmatprep.subr.bf16.mxu0 %v382
    %429 = vmatpush1.bf16.msra.mxu0 %v381
    %430 = vmatprep.subr.bf16.mxu0 %v379
    %431 = vmatpush1.bf16.msra.mxu0 %v378
    %432 = vmatprep.subr.bf16.mxu0 %v376
    %433 = vmatpush1.bf16.msra.mxu0 %v375
    %434 = vmatprep.subr.bf16.mxu0 %v373
    %435 = vmatpush1.bf16.msra.mxu0 %v372
    %436 = vmatprep.subr.bf16.mxu0 0
    %437 = vmatpush2.bf16.msra.mxu0 0
    %438 = vmatprep.subr.bf16.mxu0 0
    %439 = vmatpush2.bf16.msra.mxu0 0
    %440 = vmatprep.subr.bf16.mxu0 0
    %441 = vmatpush2.bf16.msra.mxu0 0
    %442 = vmatprep.subr.bf16.mxu0 0
    %443 = vmatpush2.bf16.msra.mxu0 0
    %444 = vmatprep.subr.bf16.mxu0 0
    %445 = vmatpush2.bf16.msra.mxu0 0
    %446 = vmatprep.subr.bf16.mxu0 0
    %447 = vmatpush2.bf16.msra.mxu0 0
    %448 = vmatprep.subr.bf16.mxu0 0
    %449 = vmatpush2.bf16.msra.mxu0 0
    %450 = vmatprep.subr.bf16.mxu0 0
    %451 = vmatpush2.bf16.msra.mxu0 0
    %452 = vmatprep.mubr.bf16.mxu0 0
    %453 = vmatmul.mubr.bf16.gmra.mxu0 %v259
    %v454 = vpop.f32.mrf.mxu0
    %v455 = vadd.f32 0.0, %v454
    %v456 = vpop.f32.mrf.mxu0
    %v457 = vadd.f32 0.0, %v456
    %v458 = vpop.f32.mrf.mxu0
    %v459 = vpop.f32.mrf.mxu0
    %460 = vdwg.mxu0
    %461 = vmatprep.subr.bf16.mxu0 0
    %462 = vmatpush1.bf16.msra.mxu0 %v395
    %463 = vmatprep.subr.bf16.mxu0 0
    %464 = vmatpush1.bf16.msra.mxu0 %v392
    %465 = vmatprep.subr.bf16.mxu0 0
    %466 = vmatpush1.bf16.msra.mxu0 %v389
    %467 = vmatprep.subr.bf16.mxu0 0
    %468 = vmatpush1.bf16.msra.mxu0 %v386
    %469 = vmatprep.subr.bf16.mxu0 0
    %470 = vmatpush1.bf16.msra.mxu0 %v383
    %471 = vmatprep.subr.bf16.mxu0 0
    %472 = vmatpush1.bf16.msra.mxu0 %v380
    %473 = vmatprep.subr.bf16.mxu0 0
    %474 = vmatpush1.bf16.msra.mxu0 %v377
    %475 = vmatprep.subr.bf16.mxu0 0
    %476 = vmatpush1.bf16.msra.mxu0 %v374
    %477 = vmatprep.subr.bf16.mxu0 0
    %478 = vmatpush2.bf16.msra.mxu0 0
    %479 = vmatprep.subr.bf16.mxu0 0
    %480 = vmatpush2.bf16.msra.mxu0 0
    %481 = vmatprep.subr.bf16.mxu0 0
    %482 = vmatpush2.bf16.msra.mxu0 0
    %483 = vmatprep.subr.bf16.mxu0 0
    %484 = vmatpush2.bf16.msra.mxu0 0
    %485 = vmatprep.subr.bf16.mxu0 0
    %486 = vmatpush2.bf16.msra.mxu0 0
    %487 = vmatprep.subr.bf16.mxu0 0
    %488 = vmatpush2.bf16.msra.mxu0 0
    %489 = vmatprep.subr.bf16.mxu0 0
    %490 = vmatpush2.bf16.msra.mxu0 0
    %491 = vmatprep.subr.bf16.mxu0 0
    %492 = vmatpush2.bf16.msra.mxu0 0
    %493 = vmatprep.mubr.bf16.mxu0 0
    %494 = vmatmul.mubr.bf16.gmra.mxu0 %v259
    %v495 = vpop.f32.mrf.mxu0
    %v496 = vadd.f32 0.0, %v495
    %v497 = vpop.f32.mrf.mxu0
    %v498 = vpop.f32.mrf.mxu0
    %v499 = vpop.f32.mrf.mxu0
    %500 = vdwg.mxu0
    %v501 = vld [vmem:[#allocation11] sm:$0x1]
    %v502 = vld [vmem:[#allocation11 + $0x3] sm:$0x1]
    %503 = vadd.xlane.f32.xlu0 %v213
    %v504 = vpop.xlane.xlu0 %503
    %v505 = vrcp.pop 128.0
    %v506 = vmul.f32 %v504, %v505
    %v507 = vmul.f32 %v213, %v213
    %508 = vadd.xlane.f32.xlu0 %v507
    %v509 = vpop.xlane.xlu0 %508
    %v510 = vmul.f32 %v509, %v505
    %v511 = vmul.f32 %v506, %v506
    %v512 = vsub.f32 %v510, %v511
    %v513 = vsub.f32 %v213, %v506
    %v514 = vadd.f32 %v512, 1e-10
    %v515 = vrsqrt.pop %v514
    %v516 = vmul.f32 %v513, %v515
    %v517 = vlaneseq
    %v518 = vshrl.u32 %v517, 7
    %v519 = vsub.s32 0, %v518
    %v520 = vrot.slane %v501, %v519
    %v521 = vmul.f32 %v516, %v520
    %v522 = vlaneseq
    %v523 = vshrl.u32 %v522, 7
    %v524 = vsub.s32 0, %v523
    %v525 = vrot.slane %v502, %v524
    %v526 = vadd.f32 %v521, %v525
    %v527 = vld [vmem:[#allocation11 + $0x6] sm:$0x1]
    %v528 = vld [vmem:[#allocation11 + $0x9] sm:$0x1]
    %529 = vadd.xlane.f32.xlu0 %v455
    %v530 = vpop.xlane.xlu0 %529
    %v531 = vmul.f32 %v530, %v505
    %v532 = vmul.f32 %v455, %v455
    %533 = vadd.xlane.f32.xlu0 %v532
    %v534 = vpop.xlane.xlu0 %533
    %v535 = vmul.f32 %v534, %v505
    %v536 = vmul.f32 %v531, %v531
    %v537 = vsub.f32 %v535, %v536
    %v538 = vsub.f32 %v455, %v531
    %v539 = vadd.f32 %v537, 1e-10
    %v540 = vrsqrt.pop %v539
    %v541 = vmul.f32 %v538, %v540
    %v542 = vlaneseq
    %v543 = vshrl.u32 %v542, 7
    %v544 = vsub.s32 0, %v543
    %v545 = vrot.slane %v527, %v544
    %v546 = vmul.f32 %v541, %v545
    %v547 = vlaneseq
    %v548 = vshrl.u32 %v547, 7
    %v549 = vsub.s32 0, %v548
    %v550 = vrot.slane %v528, %v549
    %v551 = vadd.f32 %v546, %v550
    %v552 = vld [vmem:[#allocation11 + $0x1] sm:$0x1]
    %v553 = vld [vmem:[#allocation11 + $0x4] sm:$0x1]
    %554 = vadd.xlane.f32.xlu0 %v215
    %v555 = vpop.xlane.xlu0 %554
    %v556 = vmul.f32 %v555, %v505
    %v557 = vmul.f32 %v215, %v215
    %558 = vadd.xlane.f32.xlu0 %v557
    %v559 = vpop.xlane.xlu0 %558
    %v560 = vmul.f32 %v559, %v505
    %v561 = vmul.f32 %v556, %v556
    %v562 = vsub.f32 %v560, %v561
    %v563 = vsub.f32 %v215, %v556
    %v564 = vadd.f32 %v562, 1e-10
    %v565 = vrsqrt.pop %v564
    %v566 = vmul.f32 %v563, %v565
    %v567 = vlaneseq
    %v568 = vshrl.u32 %v567, 7
    %v569 = vsub.s32 0, %v568
    %v570 = vrot.slane %v552, %v569
    %v571 = vmul.f32 %v566, %v570
    %v572 = vlaneseq
    %v573 = vshrl.u32 %v572, 7
    %v574 = vsub.s32 0, %v573
    %v575 = vrot.slane %v553, %v574
    %v576 = vadd.f32 %v571, %v575
    %v577 = vld [vmem:[#allocation11 + $0x7] sm:$0x1]
    %v578 = vld [vmem:[#allocation11 + $0xa] sm:$0x1]
    %579 = vadd.xlane.f32.xlu0 %v457
    %v580 = vpop.xlane.xlu0 %579
    %v581 = vmul.f32 %v580, %v505
    %v582 = vmul.f32 %v457, %v457
    %583 = vadd.xlane.f32.xlu0 %v582
    %v584 = vpop.xlane.xlu0 %583
    %v585 = vmul.f32 %v584, %v505
    %v586 = vmul.f32 %v581, %v581
    %v587 = vsub.f32 %v585, %v586
    %v588 = vsub.f32 %v457, %v581
    %v589 = vadd.f32 %v587, 1e-10
    %v590 = vrsqrt.pop %v589
    %v591 = vmul.f32 %v588, %v590
    %v592 = vlaneseq
    %v593 = vshrl.u32 %v592, 7
    %v594 = vsub.s32 0, %v593
    %v595 = vrot.slane %v577, %v594
    %v596 = vmul.f32 %v591, %v595
    %v597 = vlaneseq
    %v598 = vshrl.u32 %v597, 7
    %v599 = vsub.s32 0, %v598
    %v600 = vrot.slane %v578, %v599
    %v601 = vadd.f32 %v596, %v600
    %v602 = vld [vmem:[#allocation11 + $0x2] sm:$0x1]
    %v603 = vld [vmem:[#allocation11 + $0x5] sm:$0x1]
    %604 = vadd.xlane.f32.xlu0 %v254
    %v605 = vpop.xlane.xlu0 %604
    %v606 = vmul.f32 %v605, %v505
    %v607 = vmul.f32 %v254, %v254
    %608 = vadd.xlane.f32.xlu0 %v607
    %v609 = vpop.xlane.xlu0 %608
    %v610 = vmul.f32 %v609, %v505
    %v611 = vmul.f32 %v606, %v606
    %v612 = vsub.f32 %v610, %v611
    %v613 = vsub.f32 %v254, %v606
    %v614 = vadd.f32 %v612, 1e-10
    %v615 = vrsqrt.pop %v614
    %v616 = vmul.f32 %v613, %v615
    %v617 = vlaneseq
    %v618 = vshrl.u32 %v617, 7
    %v619 = vsub.s32 0, %v618
    %v620 = vrot.slane %v602, %v619
    %v621 = vmul.f32 %v616, %v620
    %v622 = vlaneseq
    %v623 = vshrl.u32 %v622, 7
    %v624 = vsub.s32 0, %v623
    %v625 = vrot.slane %v603, %v624
    %v626 = vadd.f32 %v621, %v625
    %v627 = vld [vmem:[#allocation11 + $0x8] sm:$0x1]
    %v628 = vld [vmem:[#allocation11 + $0xb] sm:$0x1]
    %629 = vadd.xlane.f32.xlu0 %v496
    %v630 = vpop.xlane.xlu0 %629
    %v631 = vmul.f32 %v630, %v505
    %v632 = vmul.f32 %v496, %v496
    %633 = vadd.xlane.f32.xlu0 %v632
    %v634 = vpop.xlane.xlu0 %633
    %v635 = vmul.f32 %v634, %v505
    %v636 = vmul.f32 %v631, %v631
    %v637 = vsub.f32 %v635, %v636
    %v638 = vsub.f32 %v496, %v631
    %v639 = vadd.f32 %v637, 1e-10
    %v640 = vrsqrt.pop %v639
    %v641 = vmul.f32 %v638, %v640
    %v642 = vlaneseq
    %v643 = vshrl.u32 %v642, 7
    %v644 = vsub.s32 0, %v643
    %v645 = vrot.slane %v627, %v644
    %v646 = vmul.f32 %v641, %v645
    %v647 = vlaneseq
    %v648 = vshrl.u32 %v647, 7
    %v649 = vsub.s32 0, %v648
    %v650 = vrot.slane %v628, %v649
    %v651 = vadd.f32 %v646, %v650
    %v652 = vld [vmem:[#allocation11 + $0xc] sm:$0x1]
    %v653 = vld [vmem:[#allocation11 + $0xd] sm:$0x1]
    %v654 = vld [vmem:[#allocation11 + $0xe] sm:$0x1]
    %v655 = vld [vmem:[#allocation11 + $0xf] sm:$0x1]
    %v656 = vadd.f32 %v526, %v551
    %v657 = vlaneseq
    %v658 = vshrl.u32 %v657, 7
    %v659 = vsub.s32 0, %v658
    %v660 = vrot.slane %v652, %v659
    %v661 = vadd.f32 %v656, %v660
    %v662 = vxor.u32 %v661, 2147483648
    %v663 = vmul.f32 %v662, 1.442695
    %v664 = vpow.pop %v663
    %v665 = vadd.f32 %v664, 1.0
    %v666 = vrcp.pop %v665
    %v667 = vmul.f32 1.0, %v666
    %v668 = vadd.f32 %v576, %v601
    %v669 = vlaneseq
    %v670 = vshrl.u32 %v669, 7
    %v671 = vsub.s32 0, %v670
    %v672 = vrot.slane %v653, %v671
    %v673 = vadd.f32 %v668, %v672
    %v674 = vxor.u32 %v673, 2147483648
    %v675 = vmul.f32 %v674, 1.442695
    %v676 = vpow.pop %v675
    %v677 = vadd.f32 %v676, 1.0
    %v678 = vrcp.pop %v677
    %v679 = vmul.f32 1.0, %v678
    %v680 = vlaneseq
    %v681 = vshrl.u32 %v680, 7
    %v682 = vsub.s32 0, %v681
    %v683 = vrot.slane %v654, %v682
    %v684 = vadd.f32 %v626, %v683
    %v685 = vlaneseq
    %v686 = vshrl.u32 %v685, 7
    %v687 = vsub.s32 0, %v686
    %v688 = vrot.slane %v655, %v687
    %v689 = vadd.f32 %v651, %v688
    %v690 = vmul.f32 %v667, %v689
    %v691 = vadd.f32 %v684, %v690
    %v692 = vtanh.pop %v691
    %v693 = vsub.f32 1.0, %v679
    %v694 = vmul.f32 %v693, %v692
    %v695 = vmul.f32 %v679, %v92
    %v696 = vadd.f32 %v694, %v695
    %697 = vst [vmem:[#allocation2] sm:$0xff] %v696
    %698 = vst [vmem:[#allocation12] sm:$0xff] %v696
    // Predicated region
    $region46: #{tpu_custom_call.1} parent=1 // pred_check
      _
    $region47: #{tpu_custom_call.1} parent=1 // pred_check_branch
      %700 = sbr.rel (0) target = $region49
    $region48: #{tpu_custom_call.1} parent=1 // pred_region
      %s702 = ssub.s32 128, 128
      %703 = vsyncadd [#allocation5], %s702
      %s705 = sshll.u32 [#allocation12], 4
      %s706 = int_to_ptr.vmem [resolvable:$true] %s705
      %708 = dma.vmem_to_hbm [thread:$0]  %s706, 128, %s5, [#allocation5]
    $region49: #{tpu_custom_call.1} parent=1 // pred_fallthru
      _
    // Predicated region
    $region50: #{tpu_custom_call.1} parent=1 // pred_check
      _
    $region51: #{tpu_custom_call.1} parent=1 // pred_check_branch
      %710 = sbr.rel (0) target = $region53
    $region52: #{tpu_custom_call.1} parent=1 // pred_region
      %711 = dma.done [#allocation5], 128
    $region53: #{tpu_custom_call.1} parent=1 // pred_fallthru
      _
    %712 = vsyncpa [#allocation4], 1
    %713 = vsyncpa [#allocation7], 1
    %714 = vsyncpa [#allocation10], 1
    %715 = vsyncpa [#allocation5], 1

</llo_original>
